<compile_context>
chip_gen: v7x
topology: tpu7x:2x2x1
jax: 0.10.0
libtpu: 0.0.40
codegen_flags: <defaults>
</compile_context>

<pallas_src>
import jax
import jax.numpy as jnp
from jax.experimental import pallas as pl
from jax.experimental.pallas import tpu as pltpu

_LANES = 128
_SUBLANES = 8


def _round_up(n, m):
    return -(-n // m) * m


def _linear_bias_kernel(x_ref, w_ref, b_ref, o_ref):
    # x: (TB, r_dim) streamed tile; w: (r_dim, out_pad) resident, pre-transposed
    # and lane-padded; b: (1, out_pad) resident.  Pure MXU push with f32
    # accumulation, one VPU broadcast-add (hidden under DMA), narrow store.
    x = x_ref[...].astype(w_ref.dtype)              # pin MXU operand dtypes
    acc = jnp.dot(x, w_ref[...], preferred_element_type=jnp.float32)
    y = acc + b_ref[...]                            # f32 bias add (v5e-safe)
    out_dim = o_ref.shape[1]
    o_ref[...] = y[:, :out_dim].astype(o_ref.dtype)


def _prepare_params(weight, bias, compute_dtype):
    """One-time prep: W (out_dim, r_dim) -> (r_dim, out_pad); b -> (1, out_pad)."""
    out_dim, r_dim = weight.shape
    out_pad = _round_up(out_dim, _LANES)
    w_t = jnp.transpose(weight).astype(compute_dtype)             # (r_dim, out_dim)
    w_t_pad = jnp.pad(w_t, ((0, 0), (0, out_pad - out_dim)))      # (r_dim, out_pad)
    b_pad = jnp.pad(bias.astype(jnp.float32).reshape(1, out_dim),
                    ((0, 0), (0, out_pad - out_dim)))             # (1, out_pad)
    return w_t_pad, b_pad


def _choose_tb(batch, block_b):
    tb = min(block_b, batch)
    if tb != batch:
        # Second-to-last block dim must be a multiple of 8 (or the full dim).
        tb = max(_SUBLANES, (tb // _SUBLANES) * _SUBLANES)
    return tb


def _linear_forward_prepped(x, w_t_pad, b_pad, out_dim, block_b):
    batch, r_dim = x.shape
    r_dim_w, out_pad = w_t_pad.shape
    assert r_dim == r_dim_w
    tb = _choose_tb(batch, block_b)
    grid_b = pl.cdiv(batch, tb)
    batch_pad = grid_b * tb
    if batch_pad != batch:
        # Rare ragged-batch fallback: zero rows, sliced off below.
        x = jnp.pad(x, ((0, batch_pad - batch), (0, 0)))
    y = pl.pallas_call(
        _linear_bias_kernel,
        out_shape=jax.ShapeDtypeStruct((batch_pad, out_dim), x.dtype),
        grid=(grid_b,),
        in_specs=[
            pl.BlockSpec((tb, r_dim), lambda i: (i, 0)),       # x: streamed tiles
            pl.BlockSpec((r_dim, out_pad), lambda i: (0, 0)),  # W: resident
            pl.BlockSpec((1, out_pad), lambda i: (0, 0)),      # bias: resident
        ],
        out_specs=pl.BlockSpec((tb, out_dim), lambda i: (i, 0)),
        compiler_params=pltpu.CompilerParams(
            dimension_semantics=("parallel",)),
    )(x, w_t_pad, b_pad)
    if batch_pad != batch:
        y = y[:batch]
    return y


def make_logits_layer_regressor(weight, bias, *, block_b=1024, compute_dtype=None):
    """Build a jitted forward for nn.Linear(r_dim, out_dim): y = x @ W.T + b.

    Param prep (transpose + pad) runs exactly once here, not per call.
    block_b: batch tile size (sweep 512-4096 for large B; kernel is mem-bound).
    compute_dtype: MXU operand dtype for W / in-kernel x cast; pass
    jnp.bfloat16 (and feed bf16 x) to halve HBM read bytes on v6e/v7x.
    """
    out_dim = weight.shape[0]
    if compute_dtype is None:
        compute_dtype = weight.dtype
    w_t_pad, b_pad = _prepare_params(weight, bias, compute_dtype)

    @jax.jit
    def forward(x):
        return _linear_forward_prepped(x, w_t_pad, b_pad, out_dim, block_b)

    return forward


if __name__ == "__main__":
    # Small shapes consistent with the module: r_dim=32, out_dim=3.
    R_DIM, OUT_DIM = 32, 3

    key = jax.random.PRNGKey(0)
    kx, kw, kb, kx2 = jax.random.split(key, 4)

    # Deterministic init mimicking nn.Linear's uniform(-1/sqrt(r_dim), 1/sqrt(r_dim)).
    bound = 1.0 / (R_DIM ** 0.5)
    weight = jax.random.uniform(kw, (OUT_DIM, R_DIM), jnp.float32, -bound, bound)
    bias = jax.random.uniform(kb, (OUT_DIM,), jnp.float32, -bound, bound)

    # Factory: params prepped once, forward is a jitted closure.
    forward = make_logits_layer_regressor(weight, bias)

    # Case 1: tiny single-tile batch (B=8).
    x = jax.random.normal(kx, (8, R_DIM), jnp.float32)
    y = forward(x)
    jax.block_until_ready(y)
    y_ref = x @ weight.T + bias
    assert y.shape == (8, OUT_DIM)
    assert jnp.allclose(y, y_ref, atol=1e-4, rtol=1e-4)

    # Case 2: multi-tile grid path with a ragged batch (exercises pad fallback).
    forward_tiled = make_logits_layer_regressor(weight, bias, block_b=16)
    x2 = jax.random.normal(kx2, (40, R_DIM), jnp.float32)
    y2 = forward_tiled(x2)
    jax.block_until_ready(y2)
    y2_ref = x2 @ weight.T + bias
    assert y2.shape == (40, OUT_DIM)
    assert jnp.allclose(y2, y2_ref, atol=1e-4, rtol=1e-4)

    print("KERNEL_OK")
</pallas_src>

<mosaic_0001>
module attributes {stable_mosaic.version = 11 : i64} {
  func.func @_linear_bias_kernel(%arg0: i32, %arg1: memref<8x32xf32, #tpu.memory_space<vmem>>, %arg2: memref<32x128xf32, #tpu.memory_space<vmem>>, %arg3: memref<1x128xf32, #tpu.memory_space<vmem>>, %arg4: memref<8x3xf32, #tpu.memory_space<vmem>>) attributes {dimension_semantics = [#tpu.dimension_semantics<parallel>], iteration_bounds = array<i64: 1>, scalar_prefetch = 0 : i64, scratch_operands = 0 : i64, tpu.core_type = #tpu.core_type<tc>, window_params = [{transform_indices = @transform_0, window_bounds = array<i64: 8, 32>}, {pipeline_mode = #tpu.pipeline_mode<synchronous>, transform_indices = @transform_1, window_bounds = array<i64: 32, 128>}, {pipeline_mode = #tpu.pipeline_mode<synchronous>, transform_indices = @transform_2, window_bounds = array<i64: 1, 128>}, {transform_indices = @transform_3, window_bounds = array<i64: 8, 3>}]} {
    %c0 = arith.constant 0 : index
    %c0_0 = arith.constant 0 : index
    %0 = vector.load %arg1[%c0, %c0_0] : memref<8x32xf32, #tpu.memory_space<vmem>>, vector<8x32xf32>
    %c0_1 = arith.constant 0 : index
    %c0_2 = arith.constant 0 : index
    %1 = vector.load %arg2[%c0_1, %c0_2] : memref<32x128xf32, #tpu.memory_space<vmem>>, vector<32x128xf32>
    %cst = arith.constant dense<0.000000e+00> : vector<8x128xf32>
    %2 = tpu.matmul %0, %1, %cst {dimension_numbers = #tpu.dot_dimension_numbers<[1], [0], [0], [1], [0, 0, 1, 1], [], []>} : vector<8x32xf32>, vector<32x128xf32>, vector<8x128xf32> -> vector<8x128xf32>
    %c0_3 = arith.constant 0 : index
    %c0_4 = arith.constant 0 : index
    %3 = vector.load %arg3[%c0_3, %c0_4] : memref<1x128xf32, #tpu.memory_space<vmem>>, vector<1x128xf32>
    %4 = vector.broadcast %3 : vector<1x128xf32> to vector<8x128xf32>
    %5 = arith.addf %2, %4 : vector<8x128xf32>
    %6 = vector.extract_strided_slice %5 {offsets = [0, 0], sizes = [8, 3], strides = [1, 1]} : vector<8x128xf32> to vector<8x3xf32>
    %c0_5 = arith.constant 0 : index
    %c0_6 = arith.constant 0 : index
    %7 = vector.load %arg4[%c0_5, %c0_6] : memref<8x3xf32, #tpu.memory_space<vmem>>, vector<8x3xf32>
    tpu.vector_store %arg4[%c0_5, %c0_6], %6 {strides = array<i32>} : memref<8x3xf32, #tpu.memory_space<vmem>>, vector<8x3xf32>,
    return
  }
  func.func @transform_0(%arg0: i32) -> (i32, i32) {
    %c0_i32 = arith.constant 0 : i32
    %c0_i32_0 = arith.constant 0 : i32
    return %arg0, %c0_i32 : i32, i32
  }
  func.func @transform_1(%arg0: i32) -> (i32, i32) {
    %c0_i32 = arith.constant 0 : i32
    %c0_i32_0 = arith.constant 0 : i32
    %c0_i32_1 = arith.constant 0 : i32
    return %c0_i32, %c0_i32_0 : i32, i32
  }
  func.func @transform_2(%arg0: i32) -> (i32, i32) {
    %c0_i32 = arith.constant 0 : i32
    %c0_i32_0 = arith.constant 0 : i32
    %c0_i32_1 = arith.constant 0 : i32
    return %c0_i32, %c0_i32_0 : i32, i32
  }
  func.func @transform_3(%arg0: i32) -> (i32, i32) {
    %c0_i32 = arith.constant 0 : i32
    %c0_i32_0 = arith.constant 0 : i32
    return %arg0, %c0_i32 : i32, i32
  }
}

</mosaic_0001>

<llo_original>
// kernel: forward.1
$region0: #{forward.1}
  #allocation0 [shape = 'u32[]', space=smem, size = 0x4, offset = 0x4, fixed_abs, tag = 'smem constant byte address 0x4 - core index']
  #allocation1 [shape = 'u32[144,128]{1,0:T(1,128)}', space=vmem, size = 0x12000, scoped, tag = 'internal scratch']
  %s0 = inlined_call_operand.hbm [shape: f32[8,32], index: 0, kind: input, shape index: {}]
  %s1 = inlined_call_operand.hbm [shape: f32[32,128], index: 1, kind: input, shape index: {}]
  %s2 = inlined_call_operand.vmem [shape: f32[1,128], index: 2, kind: input, shape index: {}]
  %s3 = inlined_call_operand.vmem [shape: f32[8,3], index: 3, kind: output, shape index: {}]
  %s4 = sld [smem:[#allocation0]]
  $region30: #{forward.1} parent=0
    _
  %s6 = ssub.s32 1, %s4
  %s7 = scalar_select 0, %s6, %s4
  $region1: #{forward.1} parent=0
    #allocation2 [shape = 'u8[4096]{0}', space=vmem, size = 0x1000, scoped, tag = 'input window, operand 0, single buffered']
    #allocation3 [shape = 's32[1]{0}', space=sflag, size = 0x4, scoped, tag = 'scoped memory for forward.1']
    #allocation4 [shape = 'u8[16384]{0}', space=vmem, size = 0x4000, scoped, tag = 'input window, operand 1, single buffered']
    #allocation5 [shape = 's32[1]{0}', space=sflag, size = 0x4, scoped, tag = 'scoped memory for forward.1']
    %8 = vsyncpa [#allocation3], 0
    %9 = vsyncpa [#allocation5], 0
    // Predicated region
    $region2: #{forward.1} parent=1 // pred_check
      _
    $region3: #{forward.1} parent=1 // pred_check_branch
      %11 = sbr.rel (0) target = $region5
    $region4: #{forward.1} parent=1 // pred_region
      %s13 = ssub.s32 128, 128
      %14 = vsyncadd [#allocation3], %s13
      %s16 = sshll.u32 [#allocation2], 4
      %s17 = int_to_ptr.vmem [resolvable:$true] %s16
      %19 = dma.hbm_to_vmem [thread:$0]  %s0, 128, %s17, [#allocation3]
    $region5: #{forward.1} parent=1 // pred_fallthru
      _
    // Predicated region
    $region6: #{forward.1} parent=1 // pred_check
      _
    $region7: #{forward.1} parent=1 // pred_check_branch
      %21 = sbr.rel (0) target = $region9
    $region8: #{forward.1} parent=1 // pred_region
      %s23 = ssub.s32 512, 512
      %24 = vsyncadd [#allocation5], %s23
      %s25 = sshll.u32 [#allocation4], 4
      %s26 = int_to_ptr.vmem [resolvable:$true] %s25
      %31 = dma.hbm_to_vmem [thread:$0]  %s1, 512, %s26, [#allocation5], 128, 128, 8
    $region9: #{forward.1} parent=1 // pred_fallthru
      _
    // Predicated region
    $region10: #{forward.1} parent=1 // pred_check
      _
    $region11: #{forward.1} parent=1 // pred_check_branch
      %33 = sbr.rel (0) target = $region13
    $region12: #{forward.1} parent=1 // pred_region
      _
    $region13: #{forward.1} parent=1 // pred_fallthru
      _
    // Predicated region
    $region14: #{forward.1} parent=1 // pred_check
      _
    $region15: #{forward.1} parent=1 // pred_check_branch
      %35 = sbr.rel (0) target = $region17
    $region16: #{forward.1} parent=1 // pred_region
      %36 = dma.done [#allocation3], 128
    $region17: #{forward.1} parent=1 // pred_fallthru
      _
    // Predicated region
    $region18: #{forward.1} parent=1 // pred_check
      _
    $region19: #{forward.1} parent=1 // pred_check_branch
      %38 = sbr.rel (0) target = $region21
    $region20: #{forward.1} parent=1 // pred_region
      %39 = dma.done [#allocation5], 512
    $region21: #{forward.1} parent=1 // pred_fallthru
      _
    %v40 = vld [vmem:[#allocation2] sm:$0xff]
    %v41 = vld [vmem:[#allocation4] sm:$0xff]
    %v42 = vld [vmem:[#allocation4 + $0x8] sm:$0xff]
    %v43 = vld [vmem:[#allocation4 + $0x10] sm:$0xff]
    %v44 = vld [vmem:[#allocation4 + $0x18] sm:$0xff]
    %v45 = vld [vmem:[%s2] sm:$0x1]
    %v47 = vlaneseq
    %v48 = vshrl.u32 %v47, 7
    %v49 = vsub.s32 0, %v48
    %v50 = vrot.slane %v45, %v49
    %vm52 = vcmask 261120
    %v54 = vsel %vm52, %v40, 0
    %56 = vmatprep.subr.mxu0 0.0
    %57 = vmatpush1.msra.mxu0 %v41
    %58 = vmatprep.subr.mxu0 0.0
    %59 = vmatpush1.msra.mxu0 %v42
    %60 = vmatprep.subr.mxu0 0.0
    %61 = vmatpush1.msra.mxu0 %v43
    %62 = vmatprep.subr.mxu0 0.0
    %63 = vmatpush1.msra.mxu0 %v44
    %64 = vmatprep.subr.mxu0 0.0
    %65 = vmatpush1.msra.mxu0 0.0
    %66 = vmatprep.subr.mxu0 0.0
    %67 = vmatpush1.msra.mxu0 0.0
    %68 = vmatprep.subr.mxu0 0.0
    %69 = vmatpush1.msra.mxu0 0.0
    %70 = vmatprep.subr.mxu0 0.0
    %71 = vmatpush1.msra.mxu0 0.0
    %72 = vmatprep.subr.mxu0 0.0
    %73 = vmatpush1.msra.mxu0 0.0
    %74 = vmatprep.subr.mxu0 0.0
    %75 = vmatpush1.msra.mxu0 0.0
    %76 = vmatprep.subr.mxu0 0.0
    %77 = vmatpush1.msra.mxu0 0.0
    %78 = vmatprep.subr.mxu0 0.0
    %79 = vmatpush1.msra.mxu0 0.0
    %80 = vmatprep.subr.mxu0 0.0
    %81 = vmatpush1.msra.mxu0 0.0
    %82 = vmatprep.subr.mxu0 0.0
    %83 = vmatpush1.msra.mxu0 0.0
    %84 = vmatprep.subr.mxu0 0.0
    %85 = vmatpush1.msra.mxu0 0.0
    %86 = vmatprep.subr.mxu0 0.0
    %87 = vmatpush1.msra.mxu0 0.0
    %88 = vmatprep.subr.mxu0 0.0
    %89 = vmatpush1.msra.mxu0 0.0
    %90 = vmatprep.subr.mxu0 0.0
    %91 = vmatpush1.msra.mxu0 0.0
    %92 = vmatprep.subr.mxu0 0.0
    %93 = vmatpush1.msra.mxu0 0.0
    %94 = vmatprep.subr.mxu0 0.0
    %95 = vmatpush1.msra.mxu0 0.0
    %96 = vmatprep.subr.mxu0 0.0
    %97 = vmatpush1.msra.mxu0 0.0
    %98 = vmatprep.subr.mxu0 0.0
    %99 = vmatpush1.msra.mxu0 0.0
    %100 = vmatprep.subr.mxu0 0.0
    %101 = vmatpush1.msra.mxu0 0.0
    %102 = vmatprep.subr.mxu0 0.0
    %103 = vmatpush1.msra.mxu0 0.0
    %104 = vmatprep.subr.mxu0 0.0
    %105 = vmatpush1.msra.mxu0 0.0
    %106 = vmatprep.subr.mxu0 0.0
    %107 = vmatpush1.msra.mxu0 0.0
    %108 = vmatprep.subr.mxu0 0.0
    %109 = vmatpush1.msra.mxu0 0.0
    %110 = vmatprep.subr.mxu0 0.0
    %111 = vmatpush1.msra.mxu0 0.0
    %112 = vmatprep.subr.mxu0 0.0
    %113 = vmatpush1.msra.mxu0 0.0
    %114 = vmatprep.subr.mxu0 0.0
    %115 = vmatpush1.msra.mxu0 0.0
    %116 = vmatprep.subr.mxu0 0.0
    %117 = vmatpush1.msra.mxu0 0.0
    %118 = vmatprep.subr.mxu0 0.0
    %119 = vmatpush1.msra.mxu0 0.0
    %120 = vmatprep.mubr.f32.mxu0 0.0
    %121 = vmatmul.mubr.f32.gmra.mrb[0].mxu0 %v54
    %v122 = vpop.f32.mrb[0].mxu0
    %v123 = vadd.f32 %v50, %v122
    %v124 = vpop.f32.mrb[0].mxu0
    %125 = vdwg.mxu0
    %vm126 = vcmask 23552
    %127 = vst.msk [vmem:[%s3] sm:$0xff] %vm126, %v123
    // Predicated region
    $region22: #{forward.1} parent=1 // pred_check
      _
    $region23: #{forward.1} parent=1 // pred_check_branch
      %129 = sbr.rel (0) target = $region25
    $region24: #{forward.1} parent=1 // pred_region
      _
    $region25: #{forward.1} parent=1 // pred_fallthru
      _
    // Predicated region
    $region26: #{forward.1} parent=1 // pred_check
      _
    $region27: #{forward.1} parent=1 // pred_check_branch
      %131 = sbr.rel (0) target = $region29
    $region28: #{forward.1} parent=1 // pred_region
      _
    $region29: #{forward.1} parent=1 // pred_fallthru
      _
    %132 = vsyncpa [#allocation3], 1
    %133 = vsyncpa [#allocation5], 1

</llo_original>
